<compile_context>
chip_gen: v7x
topology: tpu7x:2x2x1
jax: 0.10.0
libtpu: 0.0.40
codegen_flags: <defaults>
</compile_context>

<pallas_src>
import jax
import jax.numpy as jnp
import numpy as np
from jax import lax
from jax.experimental import pallas as pl
from jax.experimental.pallas import tpu as pltpu


def _round_up(x, m):
    return (x + m - 1) // m * m


def _make_fused_kernel(n_layers, out_widths):
    """Kernel: h -> (MXU matmul + bias [+ relu]) * n_layers, intermediates in VMEM."""

    def kernel(*refs):
        # refs = [x, w0, b0, w1, b1, ..., out, h_scratch]
        x_ref = refs[0]
        o_ref = refs[1 + 2 * n_layers]
        h_ref = refs[2 + 2 * n_layers]          # VMEM scratch (TB, max_inter) f32
        h = x_ref[...]                          # (TB, feat_in), bf16 (pre-cast)
        for i in range(n_layers):
            w_ref = refs[1 + 2 * i]             # (K_i, N_i) bf16, lane-padded
            b_ref = refs[2 + 2 * i]             # (1, N_i) f32
            acc = jnp.dot(h, w_ref[...], preferred_element_type=jnp.float32)
            acc = acc + b_ref[...]
            if i != n_layers - 1:
                acc = jnp.maximum(acc, 0.0)
                w = out_widths[i]               # multiple of 128 -> aligned slice
                h_ref[:, :w] = acc
                h = h_ref[:, :w].astype(jnp.bfloat16)
            else:
                o_ref[...] = acc.astype(o_ref.dtype)

    return kernel


def prepare_encoder_wave(params, L, kernel_size):
    """One-time, host-side fold of every Conv1d (zero padding + stride) into a
    dense Toeplitz matrix + flat bias, with output widths lane-padded to
    multiples of 128.  Hoisted out of the forward (perf review item 3)."""
    pad = kernel_size // 2
    n_layers = len(params)
    denses, biases, out_widths = [], [], []
    c0 = int(params[0][0].shape[1])
    c_in, l_in = c0, L
    in_pad = 0                      # zero rows induced by previous layer's lane padding
    for (w, b, s) in params:
        w_np = np.asarray(w, dtype=np.float32)
        b_np = np.asarray(b, dtype=np.float32)
        C_out, C_in, K = w_np.shape
        L_out = (l_in + 2 * pad - K) // s + 1
        # Toeplitz fold: y[co, t] = sum_{ci,l} x[ci, l] * D[ci*L_in+l, co*L_out+t]
        l_idx = np.arange(l_in)
        t_idx = np.arange(L_out)
        k = l_idx[:, None] + pad - t_idx[None, :] * s           # (L_in, L_out) tap idx
        valid = (k >= 0) & (k < K)
        k_c = np.clip(k, 0, K - 1)
        wk = w_np[:, :, k_c]                                    # (C_out, C_in, L_in, L_out)
        wk = np.where(valid[None, None], wk, 0.0)
        dense = np.transpose(wk, (1, 2, 0, 3)).reshape(C_in * l_in, C_out * L_out)
        b_flat = np.repeat(b_np, L_out)
        # Lane padding (item 7): pad N up to a multiple of 128; the matching zero
        # rows are appended to the *next* layer's dense (ReLU(0)=0 -> no effect).
        out_real = C_out * L_out
        out_padw = _round_up(out_real, 128)
        dense = np.pad(dense, ((0, in_pad), (0, out_padw - out_real)))
        b_flat = np.pad(b_flat, (0, out_padw - out_real))
        denses.append(jnp.asarray(dense, dtype=jnp.bfloat16))   # halves weight bytes
        biases.append(jnp.asarray(b_flat[None, :], dtype=jnp.float32))
        out_widths.append(out_padw)
        in_pad = out_padw - out_real
        c_in, l_in = C_out, L_out
    return dict(denses=denses, biases=biases, out_widths=out_widths,
                n_layers=n_layers, out_channels=c_in, out_length=l_in,
                in_feat=c0 * L)


def encoder_wave_forward(prep, x):
    """Pallas forward of EncoderWave: conv -> relu -> ... -> conv (no relu last).

    x: (B, 1, L) float32 in NCW.  Returns (B, encoder_dims, L_final).
    """
    B, C0, L = x.shape
    feat_in = C0 * L
    assert feat_in == prep["in_feat"]
    n_layers = prep["n_layers"]
    out_widths = prep["out_widths"]
    feat_out_pad = out_widths[-1]
    feat_out_real = prep["out_channels"] * prep["out_length"]

    # Batch rows fill the MXU M dimension (item 1).  TB = 256 matches the
    # v6e/v7x MXU and is a multiple of 8; when B <= 256 one block covers it.
    TB = B if B <= 256 else 256
    grid = (pl.cdiv(B, TB),)

    # Pre-cast input to bf16 (item 6); accumulation stays f32 in-kernel.
    x_flat = x.reshape(B, feat_in).astype(jnp.bfloat16)

    # Weights / biases: constant across the grid -> untiled, VMEM-resident
    # (item 5: no double-buffering of the dense matrices).
    vmem_full = pl.BlockSpec(memory_space=pltpu.MemorySpace.VMEM)
    in_specs = [pl.BlockSpec((TB, feat_in), lambda i: (i, 0))]
    operands = [x_flat]
    for d, bf in zip(prep["denses"], prep["biases"]):
        in_specs += [vmem_full, vmem_full]
        operands += [d, bf]

    max_inter = max(out_widths[:-1], default=128)   # widest intermediate (item 8)

    out = pl.pallas_call(
        _make_fused_kernel(n_layers, out_widths),
        out_shape=jax.ShapeDtypeStruct((B, feat_out_pad), x.dtype),
        grid=grid,
        in_specs=in_specs,
        out_specs=pl.BlockSpec((TB, feat_out_pad), lambda i: (i, 0)),
        scratch_shapes=[pltpu.VMEM((TB, max_inter), jnp.float32)],
        compiler_params=pltpu.CompilerParams(
            dimension_semantics=("parallel",)),   # pays off only when grid > 1 (item 2)
    )(*operands)

    # Drop lane padding (no-op when already 128-aligned), back to NCW.
    out = out[:, :feat_out_real]
    return out.reshape(B, prep["out_channels"], prep["out_length"])


def init_encoder_wave(key, channels, encoder_dims, kernel_size, strides):
    """Deterministic synthetic params mirroring the nn.ModuleList shapes."""
    layers = []
    in_c = 1
    for i, s in enumerate(strides):
        out_c = encoder_dims if i == len(strides) - 1 else channels
        key, kw, kb = jax.random.split(key, 3)
        fan_in = in_c * kernel_size
        bound = 1.0 / float(np.sqrt(fan_in))
        w = jax.random.uniform(kw, (out_c, in_c, kernel_size),
                               jnp.float32, -bound, bound)
        b = jax.random.uniform(kb, (out_c,), jnp.float32, -bound, bound)
        layers.append((w, b, s))
        in_c = out_c
    return layers


def encoder_wave_reference(params, x, kernel_size):
    """Plain-XLA reference of the PyTorch forward (weights bf16-rounded to match
    the kernel's bf16 weight path)."""
    pad = kernel_size // 2
    n = len(params)
    for i, (w, b, s) in enumerate(params):
        w_q = w.astype(jnp.bfloat16).astype(jnp.float32)
        y = lax.conv_general_dilated(
            x, w_q, window_strides=(s,), padding=[(pad, pad)],
            dimension_numbers=("NCH", "OIH", "NCH"))
        y = y + b[None, :, None]
        if i != n - 1:
            y = jax.nn.relu(y)
        x = y
    return x


if __name__ == "__main__":
    # args: encoder_dims=32, channels=4, kernel_size=5, strides=[2, 2, 1]
    channels, encoder_dims, kernel_size = 4, 32, 5
    strides = [2, 2, 1]

    key = jax.random.PRNGKey(0)
    kp, kx = jax.random.split(key)
    params = init_encoder_wave(kp, channels, encoder_dims, kernel_size, strides)

    B, L = 2, 64
    x = jax.random.normal(kx, (B, 1, L), dtype=jnp.float32)   # NCW, 1 input channel

    prep = prepare_encoder_wave(params, L, kernel_size)       # one-time host-side fold
    out = encoder_wave_forward(prep, x)
    out = jax.block_until_ready(out)

    ref = encoder_wave_reference(params, x, kernel_size)
    assert out.shape == ref.shape == (B, encoder_dims, 16), (out.shape, ref.shape)
    # Loose-ish tolerance: activations are re-quantized to bf16 at each layer's
    # MXU input (reference keeps f32 activations); a functional bug would be O(1) off.
    np.testing.assert_allclose(np.asarray(out), np.asarray(ref),
                               rtol=5e-2, atol=5e-2)
    print("KERNEL_OK")
</pallas_src>

<mosaic_0001>
module attributes {stable_mosaic.version = 11 : i64} {
  func.func @kernel(%arg0: i32, %arg1: memref<2x64xbf16, #tpu.memory_space<vmem>>, %arg2: memref<64x128xbf16, #tpu.memory_space<vmem>>, %arg3: memref<1x128xf32, #tpu.memory_space<vmem>>, %arg4: memref<128x128xbf16, #tpu.memory_space<vmem>>, %arg5: memref<1x128xf32, #tpu.memory_space<vmem>>, %arg6: memref<128x512xbf16, #tpu.memory_space<vmem>>, %arg7: memref<1x512xf32, #tpu.memory_space<vmem>>, %arg8: memref<2x512xf32, #tpu.memory_space<vmem>>, %arg9: memref<2x128xf32, #tpu.memory_space<vmem>>) attributes {dimension_semantics = [#tpu.dimension_semantics<parallel>], iteration_bounds = array<i64: 1>, scalar_prefetch = 0 : i64, scratch_operands = 1 : i64, tpu.core_type = #tpu.core_type<tc>, window_params = [{transform_indices = @transform_0, window_bounds = array<i64: 2, 64>}, {pipeline_mode = #tpu.pipeline_mode<synchronous>, transform_indices = @transform_1, window_bounds = array<i64: 64, 128>}, {pipeline_mode = #tpu.pipeline_mode<synchronous>, transform_indices = @transform_2, window_bounds = array<i64: 1, 128>}, {pipeline_mode = #tpu.pipeline_mode<synchronous>, transform_indices = @transform_3, window_bounds = array<i64: 128, 128>}, {pipeline_mode = #tpu.pipeline_mode<synchronous>, transform_indices = @transform_4, window_bounds = array<i64: 1, 128>}, {pipeline_mode = #tpu.pipeline_mode<synchronous>, transform_indices = @transform_5, window_bounds = array<i64: 128, 512>}, {pipeline_mode = #tpu.pipeline_mode<synchronous>, transform_indices = @transform_6, window_bounds = array<i64: 1, 512>}, {transform_indices = @transform_7, window_bounds = array<i64: 2, 512>}]} {
    %c0 = arith.constant 0 : index
    %c0_0 = arith.constant 0 : index
    %0 = vector.load %arg1[%c0, %c0_0] : memref<2x64xbf16, #tpu.memory_space<vmem>>, vector<2x64xbf16>
    %c0_1 = arith.constant 0 : index
    %c0_2 = arith.constant 0 : index
    %1 = vector.load %arg2[%c0_1, %c0_2] : memref<64x128xbf16, #tpu.memory_space<vmem>>, vector<64x128xbf16>
    %cst = arith.constant dense<0.000000e+00> : vector<2x128xf32>
    %2 = tpu.matmul %0, %1, %cst {dimension_numbers = #tpu.dot_dimension_numbers<[1], [0], [0], [1], [0, 0, 1, 1], [], []>} : vector<2x64xbf16>, vector<64x128xbf16>, vector<2x128xf32> -> vector<2x128xf32>
    %c0_3 = arith.constant 0 : index
    %c0_4 = arith.constant 0 : index
    %3 = vector.load %arg3[%c0_3, %c0_4] : memref<1x128xf32, #tpu.memory_space<vmem>>, vector<1x128xf32>
    %4 = vector.broadcast %3 : vector<1x128xf32> to vector<2x128xf32>
    %5 = arith.addf %2, %4 : vector<2x128xf32>
    %cst_5 = arith.constant 0.000000e+00 : f32
    %6 = vector.broadcast %cst_5 : f32 to vector<2x128xf32>
    %7 = arith.maximumf %5, %6 : vector<2x128xf32>
    %c0_6 = arith.constant 0 : index
    %c0_7 = arith.constant 0 : index
    %8 = vector.load %arg9[%c0_6, %c0_7] : memref<2x128xf32, #tpu.memory_space<vmem>>, vector<2x128xf32>
    tpu.vector_store %arg9[%c0_6, %c0_7], %7 {strides = array<i32>} : memref<2x128xf32, #tpu.memory_space<vmem>>, vector<2x128xf32>,
    %c0_8 = arith.constant 0 : index
    %c0_9 = arith.constant 0 : index
    %9 = vector.load %arg9[%c0_8, %c0_9] : memref<2x128xf32, #tpu.memory_space<vmem>>, vector<2x128xf32>
    %10 = arith.truncf %9 : vector<2x128xf32> to vector<2x128xbf16>
    %c0_10 = arith.constant 0 : index
    %c0_11 = arith.constant 0 : index
    %11 = vector.load %arg4[%c0_10, %c0_11] : memref<128x128xbf16, #tpu.memory_space<vmem>>, vector<128x128xbf16>
    %cst_12 = arith.constant dense<0.000000e+00> : vector<2x128xf32>
    %12 = tpu.matmul %10, %11, %cst_12 {dimension_numbers = #tpu.dot_dimension_numbers<[1], [0], [0], [1], [0, 0, 1, 1], [], []>} : vector<2x128xbf16>, vector<128x128xbf16>, vector<2x128xf32> -> vector<2x128xf32>
    %c0_13 = arith.constant 0 : index
    %c0_14 = arith.constant 0 : index
    %13 = vector.load %arg5[%c0_13, %c0_14] : memref<1x128xf32, #tpu.memory_space<vmem>>, vector<1x128xf32>
    %14 = vector.broadcast %13 : vector<1x128xf32> to vector<2x128xf32>
    %15 = arith.addf %12, %14 : vector<2x128xf32>
    %cst_15 = arith.constant 0.000000e+00 : f32
    %16 = vector.broadcast %cst_15 : f32 to vector<2x128xf32>
    %17 = arith.maximumf %15, %16 : vector<2x128xf32>
    %c0_16 = arith.constant 0 : index
    %c0_17 = arith.constant 0 : index
    %18 = vector.load %arg9[%c0_16, %c0_17] : memref<2x128xf32, #tpu.memory_space<vmem>>, vector<2x128xf32>
    tpu.vector_store %arg9[%c0_16, %c0_17], %17 {strides = array<i32>} : memref<2x128xf32, #tpu.memory_space<vmem>>, vector<2x128xf32>,
    %c0_18 = arith.constant 0 : index
    %c0_19 = arith.constant 0 : index
    %19 = vector.load %arg9[%c0_18, %c0_19] : memref<2x128xf32, #tpu.memory_space<vmem>>, vector<2x128xf32>
    %20 = arith.truncf %19 : vector<2x128xf32> to vector<2x128xbf16>
    %c0_20 = arith.constant 0 : index
    %c0_21 = arith.constant 0 : index
    %21 = vector.load %arg6[%c0_20, %c0_21] : memref<128x512xbf16, #tpu.memory_space<vmem>>, vector<128x512xbf16>
    %cst_22 = arith.constant dense<0.000000e+00> : vector<2x512xf32>
    %22 = tpu.matmul %20, %21, %cst_22 {dimension_numbers = #tpu.dot_dimension_numbers<[1], [0], [0], [1], [0, 0, 1, 1], [], []>} : vector<2x128xbf16>, vector<128x512xbf16>, vector<2x512xf32> -> vector<2x512xf32>
    %c0_23 = arith.constant 0 : index
    %c0_24 = arith.constant 0 : index
    %23 = vector.load %arg7[%c0_23, %c0_24] : memref<1x512xf32, #tpu.memory_space<vmem>>, vector<1x512xf32>
    %24 = vector.broadcast %23 : vector<1x512xf32> to vector<2x512xf32>
    %25 = arith.addf %22, %24 : vector<2x512xf32>
    %c0_25 = arith.constant 0 : index
    %c0_26 = arith.constant 0 : index
    %26 = vector.load %arg8[%c0_25, %c0_26] : memref<2x512xf32, #tpu.memory_space<vmem>>, vector<2x512xf32>
    tpu.vector_store %arg8[%c0_25, %c0_26], %25 {strides = array<i32>} : memref<2x512xf32, #tpu.memory_space<vmem>>, vector<2x512xf32>,
    return
  }
  func.func @transform_0(%arg0: i32) -> (i32, i32) {
    %c0_i32 = arith.constant 0 : i32
    %c0_i32_0 = arith.constant 0 : i32
    return %arg0, %c0_i32 : i32, i32
  }
  func.func @transform_1(%arg0: i32) -> (i32, i32) {
    %c0_i32 = arith.constant 0 : i32
    %c0_i32_0 = arith.constant 0 : i32
    %c0_i32_1 = arith.constant 0 : i32
    return %c0_i32, %c0_i32_0 : i32, i32
  }
  func.func @transform_2(%arg0: i32) -> (i32, i32) {
    %c0_i32 = arith.constant 0 : i32
    %c0_i32_0 = arith.constant 0 : i32
    %c0_i32_1 = arith.constant 0 : i32
    return %c0_i32, %c0_i32_0 : i32, i32
  }
  func.func @transform_3(%arg0: i32) -> (i32, i32) {
    %c0_i32 = arith.constant 0 : i32
    %c0_i32_0 = arith.constant 0 : i32
    %c0_i32_1 = arith.constant 0 : i32
    return %c0_i32, %c0_i32_0 : i32, i32
  }
  func.func @transform_4(%arg0: i32) -> (i32, i32) {
    %c0_i32 = arith.constant 0 : i32
    %c0_i32_0 = arith.constant 0 : i32
    %c0_i32_1 = arith.constant 0 : i32
    return %c0_i32, %c0_i32_0 : i32, i32
  }
  func.func @transform_5(%arg0: i32) -> (i32, i32) {
    %c0_i32 = arith.constant 0 : i32
    %c0_i32_0 = arith.constant 0 : i32
    %c0_i32_1 = arith.constant 0 : i32
    return %c0_i32, %c0_i32_0 : i32, i32
  }
  func.func @transform_6(%arg0: i32) -> (i32, i32) {
    %c0_i32 = arith.constant 0 : i32
    %c0_i32_0 = arith.constant 0 : i32
    %c0_i32_1 = arith.constant 0 : i32
    return %c0_i32, %c0_i32_0 : i32, i32
  }
  func.func @transform_7(%arg0: i32) -> (i32, i32) {
    %c0_i32 = arith.constant 0 : i32
    %c0_i32_0 = arith.constant 0 : i32
    return %arg0, %c0_i32 : i32, i32
  }
}

</mosaic_0001>

<llo_original>
// kernel: tpu_custom_call.1
$region0: #{tpu_custom_call.1}
  #allocation0 [shape = 'u32[]', space=smem, size = 0x4, offset = 0x4, fixed_abs, tag = 'smem constant byte address 0x4 - core index']
  #allocation1 [shape = 'u32[144,128]{1,0:T(1,128)}', space=vmem, size = 0x12000, scoped, tag = 'internal scratch']
  #allocation2 [shape = 'f32[2,128]{1,0:T(2,128)}', space=vmem, size = 0x400, scoped, tag = 'scratch operand']
  %s0 = inlined_call_operand.hbm [shape: bf16[2,64], index: 0, kind: input, shape index: {}]
  %s1 = inlined_call_operand.hbm [shape: bf16[64,128], index: 1, kind: input, shape index: {}]
  %s2 = inlined_call_operand.vmem [shape: f32[1,128], index: 2, kind: input, shape index: {}]
  %s3 = inlined_call_operand.hbm [shape: bf16[128,128], index: 3, kind: input, shape index: {}]
  %s4 = inlined_call_operand.vmem [shape: f32[1,128], index: 4, kind: input, shape index: {}]
  %s5 = inlined_call_operand.hbm [shape: bf16[128,512], index: 5, kind: input, shape index: {}]
  %s6 = inlined_call_operand.vmem [shape: f32[1,512], index: 6, kind: input, shape index: {}]
  %s7 = inlined_call_operand.hbm [shape: f32[2,512], index: 7, kind: output, shape index: {}]
  %s8 = sld [smem:[#allocation0]]
  $region54: #{tpu_custom_call.1} parent=0
    _
  %s10 = ssub.s32 1, %s8
  %s11 = scalar_select 0, %s10, %s8
  $region1: #{tpu_custom_call.1} parent=0
    #allocation3 [shape = 'u8[512]{0}', space=vmem, size = 0x400, scoped, tag = 'input window, operand 0, single buffered']
    #allocation4 [shape = 's32[1]{0}', space=sflag, size = 0x4, scoped, tag = 'scoped memory for tpu_custom_call.1']
    #allocation5 [shape = 's32[1]{0}', space=sflag, size = 0x4, scoped, tag = 'scoped memory for tpu_custom_call.1']
    #allocation6 [shape = 'u8[16384]{0}', space=vmem, size = 0x4000, scoped, tag = 'input window, operand 1, single buffered']
    #allocation7 [shape = 's32[1]{0}', space=sflag, size = 0x4, scoped, tag = 'scoped memory for tpu_custom_call.1']
    #allocation8 [shape = 'u8[32768]{0}', space=vmem, size = 0x8000, scoped, tag = 'input window, operand 3, single buffered']
    #allocation9 [shape = 'u8[131072]{0}', space=vmem, size = 0x20000, scoped, tag = 'input window, operand 5, single buffered']
    #allocation10 [shape = 's32[1]{0}', space=sflag, size = 0x4, scoped, tag = 'scoped memory for tpu_custom_call.1']
    #allocation11 [shape = 'u8[4096]{0}', space=vmem, size = 0x1000, scoped, tag = 'output window, operand 0, single buffered']
    %12 = vsyncpa [#allocation4], 0
    %13 = vsyncpa [#allocation7], 0
    %14 = vsyncpa [#allocation10], 0
    %15 = vsyncpa [#allocation5], 0
    // Predicated region
    $region2: #{tpu_custom_call.1} parent=1 // pred_check
      _
    $region3: #{tpu_custom_call.1} parent=1 // pred_check_branch
      %17 = sbr.rel (0) target = $region5
    $region4: #{tpu_custom_call.1} parent=1 // pred_region
      %s19 = ssub.s32 16, 16
      %20 = vsyncadd [#allocation4], %s19
      %s22 = sshll.u32 [#allocation3], 4
      %s23 = int_to_ptr.vmem [resolvable:$true] %s22
      %25 = dma.hbm_to_vmem [thread:$0]  %s0, 16, %s23, [#allocation4]
    $region5: #{tpu_custom_call.1} parent=1 // pred_fallthru
      _
    // Predicated region
    $region6: #{tpu_custom_call.1} parent=1 // pred_check
      _
    $region7: #{tpu_custom_call.1} parent=1 // pred_check_branch
      %27 = sbr.rel (0) target = $region9
    $region8: #{tpu_custom_call.1} parent=1 // pred_region
      %s29 = ssub.s32 512, 512
      %30 = vsyncadd [#allocation7], %s29
      %s31 = sshll.u32 [#allocation6], 4
      %s32 = int_to_ptr.vmem [resolvable:$true] %s31
      %37 = dma.hbm_to_vmem [thread:$0]  %s1, 512, %s32, [#allocation7], 64, 64, 4
    $region9: #{tpu_custom_call.1} parent=1 // pred_fallthru
      _
    // Predicated region
    $region10: #{tpu_custom_call.1} parent=1 // pred_check
      _
    $region11: #{tpu_custom_call.1} parent=1 // pred_check_branch
      %39 = sbr.rel (0) target = $region13
    $region12: #{tpu_custom_call.1} parent=1 // pred_region
      _
    $region13: #{tpu_custom_call.1} parent=1 // pred_fallthru
      _
    // Predicated region
    $region14: #{tpu_custom_call.1} parent=1 // pred_check
      _
    $region15: #{tpu_custom_call.1} parent=1 // pred_check_branch
      %41 = sbr.rel (0) target = $region17
    $region16: #{tpu_custom_call.1} parent=1 // pred_region
      %s43 = ssub.s32 1024, 1024
      %44 = vsyncadd [#allocation7], %s43
      %s45 = sshll.u32 [#allocation8], 4
      %s46 = int_to_ptr.vmem [resolvable:$true] %s45
      %51 = dma.hbm_to_vmem [thread:$0]  %s3, 1024, %s46, [#allocation7], 64, 64, 4
    $region17: #{tpu_custom_call.1} parent=1 // pred_fallthru
      _
    // Predicated region
    $region18: #{tpu_custom_call.1} parent=1 // pred_check
      _
    $region19: #{tpu_custom_call.1} parent=1 // pred_check_branch
      %53 = sbr.rel (0) target = $region21
    $region20: #{tpu_custom_call.1} parent=1 // pred_region
      _
    $region21: #{tpu_custom_call.1} parent=1 // pred_fallthru
      _
    // Predicated region
    $region22: #{tpu_custom_call.1} parent=1 // pred_check
      _
    $region23: #{tpu_custom_call.1} parent=1 // pred_check_branch
      %55 = sbr.rel (0) target = $region25
    $region24: #{tpu_custom_call.1} parent=1 // pred_region
      %s57 = ssub.s32 4096, 4096
      %58 = vsyncadd [#allocation10], %s57
      %s59 = sshll.u32 [#allocation9], 4
      %s60 = int_to_ptr.vmem [resolvable:$true] %s59
      %65 = dma.hbm_to_vmem [thread:$0]  %s5, 4096, %s60, [#allocation10], 256, 256, 16
    $region25: #{tpu_custom_call.1} parent=1 // pred_fallthru
      _
    // Predicated region
    $region26: #{tpu_custom_call.1} parent=1 // pred_check
      _
    $region27: #{tpu_custom_call.1} parent=1 // pred_check_branch
      %67 = sbr.rel (0) target = $region29
    $region28: #{tpu_custom_call.1} parent=1 // pred_region
      _
    $region29: #{tpu_custom_call.1} parent=1 // pred_fallthru
      _
    // Predicated region
    $region30: #{tpu_custom_call.1} parent=1 // pred_check
      _
    $region31: #{tpu_custom_call.1} parent=1 // pred_check_branch
      %69 = sbr.rel (0) target = $region33
    $region32: #{tpu_custom_call.1} parent=1 // pred_region
      %70 = dma.done [#allocation4], 16
    $region33: #{tpu_custom_call.1} parent=1 // pred_fallthru
      _
    // Predicated region
    $region34: #{tpu_custom_call.1} parent=1 // pred_check
      _
    $region35: #{tpu_custom_call.1} parent=1 // pred_check_branch
      %72 = sbr.rel (0) target = $region37
    $region36: #{tpu_custom_call.1} parent=1 // pred_region
      %73 = dma.done [#allocation7], 512
    $region37: #{tpu_custom_call.1} parent=1 // pred_fallthru
      _
    // Predicated region
    $region38: #{tpu_custom_call.1} parent=1 // pred_check
      _
    $region39: #{tpu_custom_call.1} parent=1 // pred_check_branch
      %75 = sbr.rel (0) target = $region41
    $region40: #{tpu_custom_call.1} parent=1 // pred_region
      %76 = dma.done [#allocation7], 1024
    $region41: #{tpu_custom_call.1} parent=1 // pred_fallthru
      _
    // Predicated region
    $region42: #{tpu_custom_call.1} parent=1 // pred_check
      _
    $region43: #{tpu_custom_call.1} parent=1 // pred_check_branch
      %78 = sbr.rel (0) target = $region45
    $region44: #{tpu_custom_call.1} parent=1 // pred_region
      %79 = dma.done [#allocation10], 4096
    $region45: #{tpu_custom_call.1} parent=1 // pred_fallthru
      _
    %v81 = vld [vmem:[#allocation3] sm:$0x1]
    %v82 = vld [vmem:[#allocation6] sm:$0xf]
    %v83 = vld [vmem:[#allocation6 + $0x4] sm:$0xf]
    %v84 = vld [vmem:[#allocation6 + $0x8] sm:$0xf]
    %v85 = vld [vmem:[#allocation6 + $0xc] sm:$0xf]
    %v86 = vld [vmem:[#allocation6 + $0x10] sm:$0xf]
    %v87 = vld [vmem:[#allocation6 + $0x14] sm:$0xf]
    %v88 = vld [vmem:[#allocation6 + $0x18] sm:$0xf]
    %v89 = vld [vmem:[#allocation6 + $0x1c] sm:$0xf]
    %v90 = vld [vmem:[%s2] sm:$0x1]
    %v92 = vlaneseq
    %v93 = vshrl.u32 %v92, 7
    %v94 = vsub.s32 0, %v93
    %v95 = vrot.slane %v90, %v94
    %v105 = vunpack.c.l.b16 %v82
    %v106 = vunpack.c.l.b16 %v83
    %v107 = vunpack.c.l.b16 %v84
    %v108 = vunpack.c.l.b16 %v85
    %v109 = vunpack.c.l.b16 %v86
    %v110 = vunpack.c.l.b16 %v87
    %v111 = vunpack.c.l.b16 %v88
    %v112 = vunpack.c.l.b16 %v89
    %v113 = vpack.c.b16 %v106, %v105
    %v114 = vpack.c.b16 %v108, %v107
    %v115 = vpack.c.b16 %v110, %v109
    %v116 = vpack.c.b16 %v112, %v111
    %vm121 = vcmask 523264
    %v123 = vsel %vm121, %v81, 0
    %125 = vmatprep.subr.bf16.mxu0 0
    %126 = vmatpush1.bf16.msra.mxu0 %v113
    %127 = vmatprep.subr.bf16.mxu0 0
    %128 = vmatpush1.bf16.msra.mxu0 %v114
    %129 = vmatprep.subr.bf16.mxu0 0
    %130 = vmatpush1.bf16.msra.mxu0 %v115
    %131 = vmatprep.subr.bf16.mxu0 0
    %132 = vmatpush1.bf16.msra.mxu0 %v116
    %133 = vmatprep.subr.bf16.mxu0 0
    %134 = vmatpush1.bf16.msra.mxu0 0
    %135 = vmatprep.subr.bf16.mxu0 0
    %136 = vmatpush1.bf16.msra.mxu0 0
    %137 = vmatprep.subr.bf16.mxu0 0
    %138 = vmatpush1.bf16.msra.mxu0 0
    %139 = vmatprep.subr.bf16.mxu0 0
    %140 = vmatpush1.bf16.msra.mxu0 0
    %141 = vmatprep.subr.bf16.mxu0 0
    %142 = vmatpush1.bf16.msra.mxu0 0
    %143 = vmatprep.subr.bf16.mxu0 0
    %144 = vmatpush1.bf16.msra.mxu0 0
    %145 = vmatprep.subr.bf16.mxu0 0
    %146 = vmatpush1.bf16.msra.mxu0 0
    %147 = vmatprep.subr.bf16.mxu0 0
    %148 = vmatpush1.bf16.msra.mxu0 0
    %149 = vmatprep.subr.bf16.mxu0 0
    %150 = vmatpush1.bf16.msra.mxu0 0
    %151 = vmatprep.subr.bf16.mxu0 0
    %152 = vmatpush1.bf16.msra.mxu0 0
    %153 = vmatprep.subr.bf16.mxu0 0
    %154 = vmatpush1.bf16.msra.mxu0 0
    %155 = vmatprep.subr.bf16.mxu0 0
    %156 = vmatpush1.bf16.msra.mxu0 0
    %157 = vmatprep.mubr.bf16.mxu0 0
    %158 = vmatmul.mubr.bf16.gmra.mrb[0].mxu0 %v123
    %v159 = vpop.f32.mrb[0].mxu0
    %v160 = vadd.f32 %v95, %v159
    %v161 = vpop.f32.mrb[0].mxu0
    %v162 = vpop.f32.mrb[0].mxu0
    %v163 = vpop.f32.mrb[0].mxu0
    %164 = vdwg.mxu0
    %v165 = vmax.f32 %v160, 0.0
    %166 = vst [vmem:[#allocation2] sm:$0x3] %v165
    %v167 = vld [vmem:[#allocation2] sm:$0x3]
    %v168 = vpack.c.bf16 %v167, %v167
    %v169 = vld [vmem:[#allocation8] sm:$0xf]
    %v170 = vld [vmem:[#allocation8 + $0x4] sm:$0xf]
    %v171 = vld [vmem:[#allocation8 + $0x8] sm:$0xf]
    %v172 = vld [vmem:[#allocation8 + $0xc] sm:$0xf]
    %v173 = vld [vmem:[#allocation8 + $0x10] sm:$0xf]
    %v174 = vld [vmem:[#allocation8 + $0x14] sm:$0xf]
    %v175 = vld [vmem:[#allocation8 + $0x18] sm:$0xf]
    %v176 = vld [vmem:[#allocation8 + $0x1c] sm:$0xf]
    %v177 = vld [vmem:[#allocation8 + $0x20] sm:$0xf]
    %v178 = vld [vmem:[#allocation8 + $0x24] sm:$0xf]
    %v179 = vld [vmem:[#allocation8 + $0x28] sm:$0xf]
    %v180 = vld [vmem:[#allocation8 + $0x2c] sm:$0xf]
    %v181 = vld [vmem:[#allocation8 + $0x30] sm:$0xf]
    %v182 = vld [vmem:[#allocation8 + $0x34] sm:$0xf]
    %v183 = vld [vmem:[#allocation8 + $0x38] sm:$0xf]
    %v184 = vld [vmem:[#allocation8 + $0x3c] sm:$0xf]
    %v185 = vld [vmem:[%s4] sm:$0x1]
    %v187 = vlaneseq
    %v188 = vshrl.u32 %v187, 7
    %v189 = vsub.s32 0, %v188
    %v190 = vrot.slane %v185, %v189
    %v208 = vunpack.c.l.b16 %v169
    %v209 = vunpack.c.l.b16 %v170
    %v210 = vunpack.c.l.b16 %v171
    %v211 = vunpack.c.l.b16 %v172
    %v212 = vunpack.c.l.b16 %v173
    %v213 = vunpack.c.l.b16 %v174
    %v214 = vunpack.c.l.b16 %v175
    %v215 = vunpack.c.l.b16 %v176
    %v216 = vunpack.c.l.b16 %v177
    %v217 = vunpack.c.l.b16 %v178
    %v218 = vunpack.c.l.b16 %v179
    %v219 = vunpack.c.l.b16 %v180
    %v220 = vunpack.c.l.b16 %v181
    %v221 = vunpack.c.l.b16 %v182
    %v222 = vunpack.c.l.b16 %v183
    %v223 = vunpack.c.l.b16 %v184
    %v224 = vpack.c.b16 %v209, %v208
    %v225 = vpack.c.b16 %v211, %v210
    %v226 = vpack.c.b16 %v213, %v212
    %v227 = vpack.c.b16 %v215, %v214
    %v228 = vpack.c.b16 %v217, %v216
    %v229 = vpack.c.b16 %v219, %v218
    %v230 = vpack.c.b16 %v221, %v220
    %v231 = vpack.c.b16 %v223, %v222
    %240 = vmatprep.subr.bf16.mxu0 0
    %241 = vmatpush1.bf16.msra.mxu0 %v224
    %242 = vmatprep.subr.bf16.mxu0 0
    %243 = vmatpush1.bf16.msra.mxu0 %v225
    %244 = vmatprep.subr.bf16.mxu0 0
    %245 = vmatpush1.bf16.msra.mxu0 %v226
    %246 = vmatprep.subr.bf16.mxu0 0
    %247 = vmatpush1.bf16.msra.mxu0 %v227
    %248 = vmatprep.subr.bf16.mxu0 0
    %249 = vmatpush1.bf16.msra.mxu0 %v228
    %250 = vmatprep.subr.bf16.mxu0 0
    %251 = vmatpush1.bf16.msra.mxu0 %v229
    %252 = vmatprep.subr.bf16.mxu0 0
    %253 = vmatpush1.bf16.msra.mxu0 %v230
    %254 = vmatprep.subr.bf16.mxu0 0
    %255 = vmatpush1.bf16.msra.mxu0 %v231
    %256 = vmatprep.subr.bf16.mxu0 0
    %257 = vmatpush1.bf16.msra.mxu0 0
    %258 = vmatprep.subr.bf16.mxu0 0
    %259 = vmatpush1.bf16.msra.mxu0 0
    %260 = vmatprep.subr.bf16.mxu0 0
    %261 = vmatpush1.bf16.msra.mxu0 0
    %262 = vmatprep.subr.bf16.mxu0 0
    %263 = vmatpush1.bf16.msra.mxu0 0
    %264 = vmatprep.subr.bf16.mxu0 0
    %265 = vmatpush1.bf16.msra.mxu0 0
    %266 = vmatprep.subr.bf16.mxu0 0
    %267 = vmatpush1.bf16.msra.mxu0 0
    %268 = vmatprep.subr.bf16.mxu0 0
    %269 = vmatpush1.bf16.msra.mxu0 0
    %270 = vmatprep.subr.bf16.mxu0 0
    %271 = vmatpush1.bf16.msra.mxu0 0
    %272 = vmatprep.mubr.bf16.mxu0 0
    %273 = vmatmul.mubr.bf16.gmra.mrb[0].mxu0 %v168
    %v274 = vpop.f32.mrb[0].mxu0
    %v275 = vadd.f32 %v190, %v274
    %v276 = vpop.f32.mrb[0].mxu0
    %v277 = vpop.f32.mrb[0].mxu0
    %v278 = vpop.f32.mrb[0].mxu0
    %279 = vdwg.mxu0
    %v280 = vmax.f32 %v275, 0.0
    %281 = vst [vmem:[#allocation2] sm:$0x3] %v280
    %v282 = vld [vmem:[#allocation2] sm:$0x3]
    %v283 = vpack.c.bf16 %v282, %v282
    %v284 = vld [vmem:[#allocation9] sm:$0xff]
    %v285 = vld [vmem:[#allocation9 + $0x8] sm:$0xff]
    %v286 = vld [vmem:[#allocation9 + $0x10] sm:$0xff]
    %v287 = vld [vmem:[#allocation9 + $0x18] sm:$0xff]
    %v288 = vld [vmem:[#allocation9 + $0x20] sm:$0xff]
    %v289 = vld [vmem:[#allocation9 + $0x28] sm:$0xff]
    %v290 = vld [vmem:[#allocation9 + $0x30] sm:$0xff]
    %v291 = vld [vmem:[#allocation9 + $0x38] sm:$0xff]
    %v292 = vld [vmem:[#allocation9 + $0x40] sm:$0xff]
    %v293 = vld [vmem:[#allocation9 + $0x48] sm:$0xff]
    %v294 = vld [vmem:[#allocation9 + $0x50] sm:$0xff]
    %v295 = vld [vmem:[#allocation9 + $0x58] sm:$0xff]
    %v296 = vld [vmem:[#allocation9 + $0x60] sm:$0xff]
    %v297 = vld [vmem:[#allocation9 + $0x68] sm:$0xff]
    %v298 = vld [vmem:[#allocation9 + $0x70] sm:$0xff]
    %v299 = vld [vmem:[#allocation9 + $0x78] sm:$0xff]
    %v300 = vld [vmem:[#allocation9 + $0x80] sm:$0xff]
    %v301 = vld [vmem:[#allocation9 + $0x88] sm:$0xff]
    %v302 = vld [vmem:[#allocation9 + $0x90] sm:$0xff]
    %v303 = vld [vmem:[#allocation9 + $0x98] sm:$0xff]
    %v304 = vld [vmem:[#allocation9 + $0xa0] sm:$0xff]
    %v305 = vld [vmem:[#allocation9 + $0xa8] sm:$0xff]
    %v306 = vld [vmem:[#allocation9 + $0xb0] sm:$0xff]
    %v307 = vld [vmem:[#allocation9 + $0xb8] sm:$0xff]
    %v308 = vld [vmem:[#allocation9 + $0xc0] sm:$0xff]
    %v309 = vld [vmem:[#allocation9 + $0xc8] sm:$0xff]
    %v310 = vld [vmem:[#allocation9 + $0xd0] sm:$0xff]
    %v311 = vld [vmem:[#allocation9 + $0xd8] sm:$0xff]
    %v312 = vld [vmem:[#allocation9 + $0xe0] sm:$0xff]
    %v313 = vld [vmem:[#allocation9 + $0xe8] sm:$0xff]
    %v314 = vld [vmem:[#allocation9 + $0xf0] sm:$0xff]
    %v315 = vld [vmem:[#allocation9 + $0xf8] sm:$0xff]
    %v316 = vld [vmem:[%s6] sm:$0xf]
    %v318 = vlaneseq
    %v319 = vshrl.u32 %v318, 7
    %v320 = vsub.s32 0, %v319
    %v321 = vrot.slane %v316, %v320
    %v322 = vlaneseq
    %v323 = vshrl.u32 %v322, 7
    %v324 = vsub.s32 1, %v323
    %v325 = vrot.slane %v316, %v324
    %v326 = vlaneseq
    %v327 = vshrl.u32 %v326, 7
    %v328 = vsub.s32 2, %v327
    %v329 = vrot.slane %v316, %v328
    %v330 = vlaneseq
    %v331 = vshrl.u32 %v330, 7
    %v332 = vsub.s32 3, %v331
    %v333 = vrot.slane %v316, %v332
    %v370 = vunpack.c.l.b16 %v284
    %v371 = vunpack.c.h.b16 %v284
    %v372 = vunpack.c.l.b16 %v285
    %v373 = vunpack.c.h.b16 %v285
    %v374 = vunpack.c.l.b16 %v286
    %v375 = vunpack.c.h.b16 %v286
    %v376 = vunpack.c.l.b16 %v287
    %v377 = vunpack.c.h.b16 %v287
    %v378 = vunpack.c.l.b16 %v288
    %v379 = vunpack.c.h.b16 %v288
    %v380 = vunpack.c.l.b16 %v289
    %v381 = vunpack.c.h.b16 %v289
    %v382 = vunpack.c.l.b16 %v290
    %v383 = vunpack.c.h.b16 %v290
    %v384 = vunpack.c.l.b16 %v291
    %v385 = vunpack.c.h.b16 %v291
    %v386 = vunpack.c.l.b16 %v292
    %v387 = vunpack.c.h.b16 %v292
    %v388 = vunpack.c.l.b16 %v293
    %v389 = vunpack.c.h.b16 %v293
    %v390 = vunpack.c.l.b16 %v294
    %v391 = vunpack.c.h.b16 %v294
    %v392 = vunpack.c.l.b16 %v295
    %v393 = vunpack.c.h.b16 %v295
    %v394 = vunpack.c.l.b16 %v296
    %v395 = vunpack.c.h.b16 %v296
    %v396 = vunpack.c.l.b16 %v297
    %v397 = vunpack.c.h.b16 %v297
    %v398 = vunpack.c.l.b16 %v298
    %v399 = vunpack.c.h.b16 %v298
    %v400 = vunpack.c.l.b16 %v299
    %v401 = vunpack.c.h.b16 %v299
    %v402 = vunpack.c.l.b16 %v300
    %v403 = vunpack.c.h.b16 %v300
    %v404 = vunpack.c.l.b16 %v301
    %v405 = vunpack.c.h.b16 %v301
    %v406 = vunpack.c.l.b16 %v302
    %v407 = vunpack.c.h.b16 %v302
    %v408 = vunpack.c.l.b16 %v303
    %v409 = vunpack.c.h.b16 %v303
    %v410 = vunpack.c.l.b16 %v304
    %v411 = vunpack.c.h.b16 %v304
    %v412 = vunpack.c.l.b16 %v305
    %v413 = vunpack.c.h.b16 %v305
    %v414 = vunpack.c.l.b16 %v306
    %v415 = vunpack.c.h.b16 %v306
    %v416 = vunpack.c.l.b16 %v307
    %v417 = vunpack.c.h.b16 %v307
    %v418 = vunpack.c.l.b16 %v308
    %v419 = vunpack.c.h.b16 %v308
    %v420 = vunpack.c.l.b16 %v309
    %v421 = vunpack.c.h.b16 %v309
    %v422 = vunpack.c.l.b16 %v310
    %v423 = vunpack.c.h.b16 %v310
    %v424 = vunpack.c.l.b16 %v311
    %v425 = vunpack.c.h.b16 %v311
    %v426 = vunpack.c.l.b16 %v312
    %v427 = vunpack.c.h.b16 %v312
    %v428 = vunpack.c.l.b16 %v313
    %v429 = vunpack.c.h.b16 %v313
    %v430 = vunpack.c.l.b16 %v314
    %v431 = vunpack.c.h.b16 %v314
    %v432 = vunpack.c.l.b16 %v315
    %v433 = vunpack.c.h.b16 %v315
    %v434 = vpack.c.b16 %v374, %v370
    %v435 = vpack.c.b16 %v375, %v371
    %v436 = vpack.c.b16 %v376, %v372
    %v437 = vpack.c.b16 %v377, %v373
    %v438 = vpack.c.b16 %v382, %v378
    %v439 = vpack.c.b16 %v383, %v379
    %v440 = vpack.c.b16 %v384, %v380
    %v441 = vpack.c.b16 %v385, %v381
    %v442 = vpack.c.b16 %v390, %v386
    %v443 = vpack.c.b16 %v391, %v387
    %v444 = vpack.c.b16 %v392, %v388
    %v445 = vpack.c.b16 %v393, %v389
    %v446 = vpack.c.b16 %v398, %v394
    %v447 = vpack.c.b16 %v399, %v395
    %v448 = vpack.c.b16 %v400, %v396
    %v449 = vpack.c.b16 %v401, %v397
    %v450 = vpack.c.b16 %v406, %v402
    %v451 = vpack.c.b16 %v407, %v403
    %v452 = vpack.c.b16 %v408, %v404
    %v453 = vpack.c.b16 %v409, %v405
    %v454 = vpack.c.b16 %v414, %v410
    %v455 = vpack.c.b16 %v415, %v411
    %v456 = vpack.c.b16 %v416, %v412
    %v457 = vpack.c.b16 %v417, %v413
    %v458 = vpack.c.b16 %v422, %v418
    %v459 = vpack.c.b16 %v423, %v419
    %v460 = vpack.c.b16 %v424, %v420
    %v461 = vpack.c.b16 %v425, %v421
    %v462 = vpack.c.b16 %v430, %v426
    %v463 = vpack.c.b16 %v431, %v427
    %v464 = vpack.c.b16 %v432, %v428
    %v465 = vpack.c.b16 %v433, %v429
    %498 = vmatprep.subr.bf16.mxu0 %v435
    %499 = vmatpush1.bf16.msra.mxu0 %v434
    %500 = vmatprep.subr.bf16.mxu0 %v439
    %501 = vmatpush1.bf16.msra.mxu0 %v438
    %502 = vmatprep.subr.bf16.mxu0 %v443
    %503 = vmatpush1.bf16.msra.mxu0 %v442
    %504 = vmatprep.subr.bf16.mxu0 %v447
    %505 = vmatpush1.bf16.msra.mxu0 %v446
    %506 = vmatprep.subr.bf16.mxu0 %v451
    %507 = vmatpush1.bf16.msra.mxu0 %v450
    %508 = vmatprep.subr.bf16.mxu0 %v455
    %509 = vmatpush1.bf16.msra.mxu0 %v454
    %510 = vmatprep.subr.bf16.mxu0 %v459
    %511 = vmatpush1.bf16.msra.mxu0 %v458
    %512 = vmatprep.subr.bf16.mxu0 %v463
    %513 = vmatpush1.bf16.msra.mxu0 %v462
    %514 = vmatprep.subr.bf16.mxu0 0
    %515 = vmatpush1.bf16.msra.mxu0 0
    %516 = vmatprep.subr.bf16.mxu0 0
    %517 = vmatpush1.bf16.msra.mxu0 0
    %518 = vmatprep.subr.bf16.mxu0 0
    %519 = vmatpush1.bf16.msra.mxu0 0
    %520 = vmatprep.subr.bf16.mxu0 0
    %521 = vmatpush1.bf16.msra.mxu0 0
    %522 = vmatprep.subr.bf16.mxu0 0
    %523 = vmatpush1.bf16.msra.mxu0 0
    %524 = vmatprep.subr.bf16.mxu0 0
    %525 = vmatpush1.bf16.msra.mxu0 0
    %526 = vmatprep.subr.bf16.mxu0 0
    %527 = vmatpush1.bf16.msra.mxu0 0
    %528 = vmatprep.subr.bf16.mxu0 0
    %529 = vmatpush1.bf16.msra.mxu0 0
    %530 = vmatprep.mubr.bf16.mxu0 0
    %531 = vmatmul.mubr.bf16.gmra.mrb[0].mxu0 %v283
    %v532 = vpop.f32.mrb[0].mxu0
    %v533 = vadd.f32 %v321, %v532
    %v534 = vpop.f32.mrb[0].mxu0
    %v535 = vadd.f32 %v325, %v534
    %v536 = vpop.f32.mrb[0].mxu0
    %v537 = vpop.f32.mrb[0].mxu0
    %538 = vdwg.mxu0
    %539 = vmatprep.subr.bf16.mxu0 %v437
    %540 = vmatpush1.bf16.msra.mxu0 %v436
    %541 = vmatprep.subr.bf16.mxu0 %v441
    %542 = vmatpush1.bf16.msra.mxu0 %v440
    %543 = vmatprep.subr.bf16.mxu0 %v445
    %544 = vmatpush1.bf16.msra.mxu0 %v444
    %545 = vmatprep.subr.bf16.mxu0 %v449
    %546 = vmatpush1.bf16.msra.mxu0 %v448
    %547 = vmatprep.subr.bf16.mxu0 %v453
    %548 = vmatpush1.bf16.msra.mxu0 %v452
    %549 = vmatprep.subr.bf16.mxu0 %v457
    %550 = vmatpush1.bf16.msra.mxu0 %v456
    %551 = vmatprep.subr.bf16.mxu0 %v461
    %552 = vmatpush1.bf16.msra.mxu0 %v460
    %553 = vmatprep.subr.bf16.mxu0 %v465
    %554 = vmatpush1.bf16.msra.mxu0 %v464
    %555 = vmatprep.subr.bf16.mxu0 0
    %556 = vmatpush1.bf16.msra.mxu0 0
    %557 = vmatprep.subr.bf16.mxu0 0
    %558 = vmatpush1.bf16.msra.mxu0 0
    %559 = vmatprep.subr.bf16.mxu0 0
    %560 = vmatpush1.bf16.msra.mxu0 0
    %561 = vmatprep.subr.bf16.mxu0 0
    %562 = vmatpush1.bf16.msra.mxu0 0
    %563 = vmatprep.subr.bf16.mxu0 0
    %564 = vmatpush1.bf16.msra.mxu0 0
    %565 = vmatprep.subr.bf16.mxu0 0
    %566 = vmatpush1.bf16.msra.mxu0 0
    %567 = vmatprep.subr.bf16.mxu0 0
    %568 = vmatpush1.bf16.msra.mxu0 0
    %569 = vmatprep.subr.bf16.mxu0 0
    %570 = vmatpush1.bf16.msra.mxu0 0
    %571 = vmatprep.mubr.bf16.mxu0 0
    %572 = vmatmul.mubr.bf16.gmra.mrb[0].mxu0 %v283
    %v573 = vpop.f32.mrb[0].mxu0
    %v574 = vadd.f32 %v329, %v573
    %v575 = vpop.f32.mrb[0].mxu0
    %v576 = vadd.f32 %v333, %v575
    %v577 = vpop.f32.mrb[0].mxu0
    %v578 = vpop.f32.mrb[0].mxu0
    %579 = vdwg.mxu0
    %v584 = vcombine.low %v533, %v535
    %v585 = vcombine.low %v574, %v576
    %v587 = vunpack.c.l.s4 1983009808
    %v588 = vunpack.c.0.s8 %v587
    %v589 = vlaneseq
    %v590 = vshrl.u32 %v589, 7
    %v591 = vsub.s32 %v588, %v590
    %v592 = vrot.slane %v584, %v591
    %v594 = vunpack.c.l.s4 1983009808
    %v595 = vunpack.c.0.s8 %v594
    %v596 = vlaneseq
    %v597 = vshrl.u32 %v596, 7
    %v598 = vsub.s32 %v595, %v597
    %v599 = vrot.slane %v585, %v598
    %v600 = vcombine.low %v592, %v599
    %602 = vst [vmem:[#allocation11] sm:$0xff] %v600
    // Predicated region
    $region46: #{tpu_custom_call.1} parent=1 // pred_check
      _
    $region47: #{tpu_custom_call.1} parent=1 // pred_check_branch
      %604 = sbr.rel (0) target = $region49
    $region48: #{tpu_custom_call.1} parent=1 // pred_region
      %s606 = ssub.s32 128, 128
      %607 = vsyncadd [#allocation5], %s606
      %s609 = sshll.u32 [#allocation11], 4
      %s610 = int_to_ptr.vmem [resolvable:$true] %s609
      %612 = dma.vmem_to_hbm [thread:$0]  %s610, 128, %s7, [#allocation5]
    $region49: #{tpu_custom_call.1} parent=1 // pred_fallthru
      _
    // Predicated region
    $region50: #{tpu_custom_call.1} parent=1 // pred_check
      _
    $region51: #{tpu_custom_call.1} parent=1 // pred_check_branch
      %614 = sbr.rel (0) target = $region53
    $region52: #{tpu_custom_call.1} parent=1 // pred_region
      %615 = dma.done [#allocation5], 128
    $region53: #{tpu_custom_call.1} parent=1 // pred_fallthru
      _
    %616 = vsyncpa [#allocation4], 1
    %617 = vsyncpa [#allocation7], 1
    %618 = vsyncpa [#allocation10], 1
    %619 = vsyncpa [#allocation5], 1

</llo_original>
